<compile_context>
chip_gen: v6e
topology: v6e:2x2x1
jax: 0.10.0
libtpu: 0.0.40
codegen_flags: <defaults>
</compile_context>

<pallas_src>
import jax
import jax.numpy as jnp
from jax.experimental import pallas as pl
from jax.experimental.pallas import tpu as pltpu


def _round_up(a, m):
    return ((a + m - 1) // m) * m


# ----------------------------- Pallas kernels ------------------------------

def _proj_concat_kernel(e_ref, x_ref, w1a_ref, w1b_ref, o_ref):
    # t1 = emb @ W1[:emb_dim] + x @ W1[emb_dim:]   (== cat(emb, x) @ W1, no HBM concat)
    o_ref[...] = (
        jnp.dot(e_ref[...], w1a_ref[...], preferred_element_type=jnp.float32)
        + jnp.dot(x_ref[...], w1b_ref[...], preferred_element_type=jnp.float32)
    ).astype(o_ref.dtype)


def _proj_single_kernel(e_ref, w1_ref, o_ref):
    # t1 = emb @ W1   (x is None case)
    o_ref[...] = jnp.dot(e_ref[...], w1_ref[...],
                         preferred_element_type=jnp.float32).astype(o_ref.dtype)


def _prop_relu_project_kernel(adj_ref, t_ref, b_ref, w_ref, o_ref, acc_ref):
    # out = relu(adj @ t + b) @ W   -- accumulate adj@t over k tiles, fuse epilogue.
    k = pl.program_id(1)

    @pl.when(k == 0)
    def _():
        acc_ref[...] = jnp.zeros_like(acc_ref)

    acc_ref[...] += jnp.dot(adj_ref[...].astype(jnp.float32), t_ref[...],
                            preferred_element_type=jnp.float32)

    @pl.when(k == pl.num_programs(1) - 1)
    def _():
        h1 = jnp.maximum(acc_ref[...] + b_ref[...], 0.0)
        o_ref[...] = jnp.dot(h1, w_ref[...],
                             preferred_element_type=jnp.float32).astype(o_ref.dtype)


def _prop_bias_kernel(adj_ref, t_ref, b_ref, o_ref, acc_ref):
    # out = adj @ t + b
    k = pl.program_id(1)

    @pl.when(k == 0)
    def _():
        acc_ref[...] = jnp.zeros_like(acc_ref)

    acc_ref[...] += jnp.dot(adj_ref[...].astype(jnp.float32), t_ref[...],
                            preferred_element_type=jnp.float32)

    @pl.when(k == pl.num_programs(1) - 1)
    def _():
        o_ref[...] = (acc_ref[...] + b_ref[...]).astype(o_ref.dtype)


def _linkpred_kernel(hsT_ref, hdT_ref, w1T_ref, b1_ref, w2T_ref, b2_ref, o_ref):
    # Transposed link-MLP: every tile is (H, te) / (1, te), so the lane axis is
    # always 128-dense and the output store is a full-width (1, te) row.
    zT = hsT_ref[...] * hdT_ref[...]                                   # (H, te)
    z1T = jnp.maximum(
        jnp.dot(w1T_ref[...], zT, preferred_element_type=jnp.float32) + b1_ref[...],
        0.0)                                                           # (H, te)
    logits = jnp.dot(w2T_ref[...], z1T,
                     preferred_element_type=jnp.float32) + b2_ref[...]  # (1, te)
    o_ref[...] = jax.nn.sigmoid(logits).astype(o_ref.dtype)


# ----------------------------- pallas_call wrappers -------------------------

def _project_in(emb, x, w1, *, tile_n):
    """t1 = cat(emb, x) @ W1  (without materializing the concat)."""
    Np = emb.shape[0]
    H = w1.shape[1]
    grid = (Np // tile_n,)
    cp = pltpu.CompilerParams(dimension_semantics=("parallel",))

    if x is None:
        return pl.pallas_call(
            _proj_single_kernel,
            out_shape=jax.ShapeDtypeStruct((Np, H), jnp.float32),
            grid=grid,
            in_specs=[pl.BlockSpec((tile_n, emb.shape[1]), lambda i: (i, 0)),
                      pl.BlockSpec(w1.shape, lambda i: (0, 0))],
            out_specs=pl.BlockSpec((tile_n, H), lambda i: (i, 0)),
            compiler_params=cp,
        )(emb, w1)

    emb_dim = emb.shape[1]
    w1a = w1[:emb_dim]
    w1b = w1[emb_dim:]
    return pl.pallas_call(
        _proj_concat_kernel,
        out_shape=jax.ShapeDtypeStruct((Np, H), jnp.float32),
        grid=grid,
        in_specs=[pl.BlockSpec((tile_n, emb_dim), lambda i: (i, 0)),
                  pl.BlockSpec((tile_n, x.shape[1]), lambda i: (i, 0)),
                  pl.BlockSpec(w1a.shape, lambda i: (0, 0)),
                  pl.BlockSpec(w1b.shape, lambda i: (0, 0))],
        out_specs=pl.BlockSpec((tile_n, H), lambda i: (i, 0)),
        compiler_params=cp,
    )(emb, x, w1a, w1b)


def _propagate(adj, t, b, w_post, *, tile_n):
    """out = relu(adj @ t + b) @ w_post   (if w_post given)
       out = adj @ t + b                   (otherwise)
    Tiled (N/tm, N/tk) accumulator grid; reduction axis last / "arbitrary"."""
    Np = adj.shape[0]
    H = t.shape[1]
    grid = (Np // tile_n, Np // tile_n)

    in_specs = [pl.BlockSpec((tile_n, tile_n), lambda i, k: (i, k)),   # adj tile
                pl.BlockSpec((tile_n, H), lambda i, k: (k, 0)),        # t rows (k)
                pl.BlockSpec((1, H), lambda i, k: (0, 0))]             # bias
    args = [adj, t, b]
    if w_post is not None:
        in_specs.append(pl.BlockSpec((H, H), lambda i, k: (0, 0)))     # fused W2
        args.append(w_post)
        kernel = _prop_relu_project_kernel
    else:
        kernel = _prop_bias_kernel

    return pl.pallas_call(
        kernel,
        out_shape=jax.ShapeDtypeStruct((Np, H), jnp.float32),
        grid=grid,
        in_specs=in_specs,
        out_specs=pl.BlockSpec((tile_n, H), lambda i, k: (i, 0)),
        scratch_shapes=[pltpu.VMEM((tile_n, H), jnp.float32)],
        compiler_params=pltpu.CompilerParams(
            dimension_semantics=("parallel", "arbitrary"),
            # modest explicit limit with headroom; tiles are sized for v7x's
            # 64 MiB physical VMEM as well as v5e/v6e.
            vmem_limit_bytes=32 * 1024 * 1024),
    )(*args)


def _linkpred(hsT, hdT, wl1, bl1, wl2, bl2, *, tile_e):
    """sigmoid(relu((hs*hd) @ Wl1 + bl1) @ Wl2 + bl2), transposed, lane-dense out."""
    H, Ep = hsT.shape
    grid = (Ep // tile_e,)
    w1T = wl1.T                 # (H_out, H_in)
    b1c = bl1.reshape(H, 1)     # column bias
    w2T = wl2.T                 # (1, H)
    b2s = bl2.reshape(1, 1)
    return pl.pallas_call(
        _linkpred_kernel,
        out_shape=jax.ShapeDtypeStruct((1, Ep), jnp.float32),
        grid=grid,
        in_specs=[pl.BlockSpec((H, tile_e), lambda i: (0, i)),
                  pl.BlockSpec((H, tile_e), lambda i: (0, i)),
                  pl.BlockSpec((H, H), lambda i: (0, 0)),
                  pl.BlockSpec((H, 1), lambda i: (0, 0)),
                  pl.BlockSpec((1, H), lambda i: (0, 0)),
                  pl.BlockSpec((1, 1), lambda i: (0, 0))],
        out_specs=pl.BlockSpec((1, tile_e), lambda i: (0, i)),
        compiler_params=pltpu.CompilerParams(dimension_semantics=("parallel",)),
    )(hsT, hdT, w1T, b1c, w2T, b2s)


# ------------------------------- LinkGNN wrapper ----------------------------

def link_gnn_forward(params, x, edges, adj, *, tile_n=256, tile_e=512,
                     cast_adj_bf16=True):
    """Mirrors LinkGNN.forward(x, edges, adj)."""
    emb_w = params["emb_weight"]
    N = adj.shape[0]

    # ---- pad node dimension to a tile multiple ----
    tile_n = min(tile_n, _round_up(N, 128))
    Np = _round_up(N, tile_n)
    if Np != N:
        emb_p = jnp.pad(emb_w, ((0, Np - N), (0, 0)))
        x_p = None if x is None else jnp.pad(x, ((0, Np - N), (0, 0)))
        adj_p = jnp.pad(adj, ((0, Np - N), (0, Np - N)))
    else:
        emb_p, x_p, adj_p = emb_w, x, adj

    # adj values are 0/1 here -> exact in bf16; halves HBM/VMEM traffic for the
    # dominant (mem-bound) adj matmuls. Set cast_adj_bf16=False for an
    # arbitrarily-weighted propagation matrix if bit-exact f32 is required.
    if cast_adj_bf16:
        adj_p = adj_p.astype(jnp.bfloat16)

    # ---- 2-layer GCN, re-associated: (adj@X)@W == adj@(X@W) ----
    t1 = _project_in(emb_p, x_p, params["w1"], tile_n=tile_n)               # X @ W1
    t2 = _propagate(adj_p, t1, params["b1"], params["w2"], tile_n=tile_n)   # relu(adj@t1+b1) @ W2
    h = _propagate(adj_p, t2, params["b2"], None, tile_n=tile_n)            # adj@t2 + b2

    # ---- edge gather (plain XLA glue), transposed so features sit on sublanes
    #      and edges land on the lane axis inside the linkpred kernel ----
    src, dst = edges[0], edges[1]
    E = src.shape[0]
    tile_e = min(tile_e, _round_up(E, 128))
    Ep = _round_up(E, tile_e)
    if Ep != E:
        src = jnp.pad(src, (0, Ep - E))
        dst = jnp.pad(dst, (0, Ep - E))
    hsT = jnp.take(h, src, axis=0).T    # (H, Ep)
    hdT = jnp.take(h, dst, axis=0).T    # (H, Ep)

    out_row = _linkpred(hsT, hdT, params["wl1"], params["bl1"],
                        params["wl2"], params["bl2"], tile_e=tile_e)  # (1, Ep)
    return out_row[0, :E].reshape(E, 1)


def init_params(key, num_nodes, emb_dim, feat_dim, hidden):
    in_dim = emb_dim + feat_dim
    ks = jax.random.split(key, 9)

    def u(k, shape, fan_in):
        bound = 1.0 / jnp.sqrt(fan_in)
        return jax.random.uniform(k, shape, jnp.float32, -bound, bound)

    return {
        "emb_weight": 0.1 * jax.random.normal(ks[0], (num_nodes, emb_dim), jnp.float32),
        "w1": u(ks[1], (in_dim, hidden), in_dim),
        "b1": u(ks[2], (1, hidden), in_dim),
        "w2": u(ks[3], (hidden, hidden), hidden),
        "b2": u(ks[4], (1, hidden), hidden),
        "wl1": u(ks[5], (hidden, hidden), hidden),
        "bl1": u(ks[6], (1, hidden), hidden),
        "wl2": u(ks[7], (hidden, 1), hidden),
        "bl2": u(ks[8], (1, 1), hidden),
    }


if __name__ == "__main__":
    key = jax.random.PRNGKey(0)
    # small but non-trivial shapes: exercises row/col tiling (N=500 -> padded 512,
    # 2x2 accumulator grid) and multi-tile edge batches (E=1000 -> padded 1024).
    N, emb_dim, feat_dim, hidden, E = 500, 16, 16, 128, 1000

    k_p, k_x, k_adj, k_e = jax.random.split(key, 4)
    params = init_params(k_p, N, emb_dim, feat_dim, hidden)

    x = 0.1 * jax.random.normal(k_x, (N, feat_dim), jnp.float32)
    # symmetric dense 0/1 adjacency with self loops (GCN propagation matrix)
    a = (jax.random.uniform(k_adj, (N, N)) < 0.02).astype(jnp.float32)
    adj = jnp.clip(a + a.T + jnp.eye(N, dtype=jnp.float32), 0.0, 1.0)
    edges = jax.random.randint(k_e, (2, E), 0, N, dtype=jnp.int32)

    out = jax.block_until_ready(link_gnn_forward(params, x, edges, adj))
    assert out.shape == (E, 1)

    # pure-JAX reference in the ORIGINAL (un-reassociated) formulation
    xin = jnp.concatenate([params["emb_weight"], x], axis=1)
    h1 = jax.nn.relu((adj @ xin) @ params["w1"] + params["b1"])
    h_ref = (adj @ h1) @ params["w2"] + params["b2"]
    z = h_ref[edges[0]] * h_ref[edges[1]]
    z = jax.nn.relu(z @ params["wl1"] + params["bl1"])
    ref = jax.nn.sigmoid(z @ params["wl2"] + params["bl2"])
    assert jnp.allclose(out, ref, atol=1e-4, rtol=1e-4), float(jnp.abs(out - ref).max())

    print("KERNEL_OK")
</pallas_src>

<mosaic_0001>
module attributes {stable_mosaic.version = 11 : i64} {
  func.func @_proj_concat_kernel(%arg0: i32, %arg1: memref<256x16xf32, #tpu.memory_space<vmem>>, %arg2: memref<256x16xf32, #tpu.memory_space<vmem>>, %arg3: memref<16x128xf32, #tpu.memory_space<vmem>>, %arg4: memref<16x128xf32, #tpu.memory_space<vmem>>, %arg5: memref<256x128xf32, #tpu.memory_space<vmem>>) attributes {dimension_semantics = [#tpu.dimension_semantics<parallel>], iteration_bounds = array<i64: 2>, scalar_prefetch = 0 : i64, scratch_operands = 0 : i64, tpu.core_type = #tpu.core_type<tc>, window_params = [{transform_indices = @transform_0, window_bounds = array<i64: 256, 16>}, {transform_indices = @transform_1, window_bounds = array<i64: 256, 16>}, {pipeline_mode = #tpu.pipeline_mode<synchronous>, transform_indices = @transform_2, window_bounds = array<i64: 16, 128>}, {pipeline_mode = #tpu.pipeline_mode<synchronous>, transform_indices = @transform_3, window_bounds = array<i64: 16, 128>}, {transform_indices = @transform_4, window_bounds = array<i64: 256, 128>}]} {
    %c0 = arith.constant 0 : index
    %c0_0 = arith.constant 0 : index
    %0 = vector.load %arg1[%c0, %c0_0] : memref<256x16xf32, #tpu.memory_space<vmem>>, vector<256x16xf32>
    %c0_1 = arith.constant 0 : index
    %c0_2 = arith.constant 0 : index
    %1 = vector.load %arg3[%c0_1, %c0_2] : memref<16x128xf32, #tpu.memory_space<vmem>>, vector<16x128xf32>
    %cst = arith.constant dense<0.000000e+00> : vector<256x128xf32>
    %2 = tpu.matmul %0, %1, %cst {dimension_numbers = #tpu.dot_dimension_numbers<[1], [0], [0], [1], [0, 0, 1, 1], [], []>} : vector<256x16xf32>, vector<16x128xf32>, vector<256x128xf32> -> vector<256x128xf32>
    %c0_3 = arith.constant 0 : index
    %c0_4 = arith.constant 0 : index
    %3 = vector.load %arg2[%c0_3, %c0_4] : memref<256x16xf32, #tpu.memory_space<vmem>>, vector<256x16xf32>
    %c0_5 = arith.constant 0 : index
    %c0_6 = arith.constant 0 : index
    %4 = vector.load %arg4[%c0_5, %c0_6] : memref<16x128xf32, #tpu.memory_space<vmem>>, vector<16x128xf32>
    %cst_7 = arith.constant dense<0.000000e+00> : vector<256x128xf32>
    %5 = tpu.matmul %3, %4, %cst_7 {dimension_numbers = #tpu.dot_dimension_numbers<[1], [0], [0], [1], [0, 0, 1, 1], [], []>} : vector<256x16xf32>, vector<16x128xf32>, vector<256x128xf32> -> vector<256x128xf32>
    %6 = arith.addf %2, %5 : vector<256x128xf32>
    %c0_8 = arith.constant 0 : index
    %c0_9 = arith.constant 0 : index
    %7 = vector.load %arg5[%c0_8, %c0_9] : memref<256x128xf32, #tpu.memory_space<vmem>>, vector<256x128xf32>
    tpu.vector_store %arg5[%c0_8, %c0_9], %6 {strides = array<i32>} : memref<256x128xf32, #tpu.memory_space<vmem>>, vector<256x128xf32>,
    return
  }
  func.func @transform_0(%arg0: i32) -> (i32, i32) {
    %c0_i32 = arith.constant 0 : i32
    %c0_i32_0 = arith.constant 0 : i32
    return %arg0, %c0_i32 : i32, i32
  }
  func.func @transform_1(%arg0: i32) -> (i32, i32) {
    %c0_i32 = arith.constant 0 : i32
    %c0_i32_0 = arith.constant 0 : i32
    return %arg0, %c0_i32 : i32, i32
  }
  func.func @transform_2(%arg0: i32) -> (i32, i32) {
    %c0_i32 = arith.constant 0 : i32
    %c0_i32_0 = arith.constant 0 : i32
    %c0_i32_1 = arith.constant 0 : i32
    return %c0_i32, %c0_i32_0 : i32, i32
  }
  func.func @transform_3(%arg0: i32) -> (i32, i32) {
    %c0_i32 = arith.constant 0 : i32
    %c0_i32_0 = arith.constant 0 : i32
    %c0_i32_1 = arith.constant 0 : i32
    return %c0_i32, %c0_i32_0 : i32, i32
  }
  func.func @transform_4(%arg0: i32) -> (i32, i32) {
    %c0_i32 = arith.constant 0 : i32
    %c0_i32_0 = arith.constant 0 : i32
    return %arg0, %c0_i32 : i32, i32
  }
}

</mosaic_0001>

<llo_original>
// kernel: tpu_custom_call.1
$region0: #{tpu_custom_call.1}
  #allocation0 [shape = 'u32[]', space=smem, size = 0x4, offset = 0x4, fixed_abs, tag = 'smem constant byte address 0x4 - core index']
  #allocation1 [shape = 'u32[144,128]{1,0:T(1,128)}', space=vmem, size = 0x12000, scoped, tag = 'internal scratch']
  %s0 = inlined_call_operand.vmem [shape: f32[512,16], index: 0, kind: input, shape index: {}]
  %s1 = inlined_call_operand.vmem [shape: f32[512,16], index: 1, kind: input, shape index: {}]
  %s2 = inlined_call_operand.vmem [shape: f32[16,128], index: 2, kind: input, shape index: {}]
  %s3 = inlined_call_operand.vmem [shape: f32[16,128], index: 3, kind: input, shape index: {}]
  %s4 = inlined_call_operand.hbm [shape: f32[512,128], index: 4, kind: output, shape index: {}]
  %s5 = sld [smem:[#allocation0]]
  $region49: #{tpu_custom_call.1} parent=0
    _
  %s7 = ssub.s32 1, %s5
  %s8 = scalar_select 0, %s7, %s5
  $region1: #{tpu_custom_call.1} parent=0
    #allocation2 [shape = 'u8[262144]{0}', space=vmem, size = 0x40000, scoped, tag = 'output window, operand 0']
    #allocation3 [shape = 's32[2]{0}', space=sflag, size = 0x8, scoped, tag = 'scoped memory for tpu_custom_call.1']
    %9 = vsyncpa [#allocation3], 0
    %s10 = scalar_lea.sflag [#allocation3], 1
    %11 = vsyncpa %s10, 0
    loop: start=0, step=1, limit=4
    $region2: #{tpu_custom_call.1} parent=1 // loop_pre_header
      _
    $region3: #{tpu_custom_call.1} parent=1 // loop_header
      %s13 = sphi 0, %s17
      %p14 = scmp.ge.s32.totalorder %s13, 4
      %s23 = sphi 0, %s25
      %s26 = sphi 0, %s23
      %s27 = sphi 0, %s26
      %s43 = sphi 0, %s27
      %s49 = sphi 0, %s51
      %s52 = sphi 0, %s49
      %s53 = sphi 0, %s52
      %s69 = sphi 0, %s53
      %s73 = sphi 0, %s73
      %s75 = sphi 0, %s73
      %s76 = sphi 0, %s75
      %s90 = sphi 0, %s76
      %s94 = sphi 0, %s94
      %s96 = sphi 0, %s94
      %s97 = sphi 0, %s96
      %s111 = sphi 0, %s97
      %s117 = sphi 0, %s119
      %s120 = sphi 0, %s117
      %s121 = sphi 0, %s120
      %s137 = sphi 0, %s121
    $region4: #{tpu_custom_call.1} parent=1 // loop_header_branch
      %16 = sbr.rel (%p14) target = $region8
    $region5: #{tpu_custom_call.1} parent=1 // loop_body
      %s18 = ssub.s32 %s13, 1
      %s19 = ssub.s32 %s13, 2
      %s20 = sadd.s32 %s13, 1
      %s21 = ssub.s32 %s13, %s20
      %p22 = scmp.eq.s32.totalorder %s21, 0
      %s24 = sadd.s32 %s23, 1
      %s25 = scalar_select %p22, %s23, %s24
      %p28 = pneg %p22
      %p29 = scmp.eq.s32.totalorder %s13, 1
      %p30 = por %p28, %p29
      %p31 = scmp.ne.s32.totalorder %s23, %s26
      %p32 = scmp.eq.s32.totalorder %s13, 0
      %p33 = por %p31, %p32
      %p34 = scmp.ne.s32.totalorder %s23, %s26
      %p35 = scmp.eq.s32.totalorder %s18, 1
      %p36 = por %p34, %p35
      %p37 = scmp.ne.s32.totalorder %s26, %s27
      %p38 = scmp.eq.s32.totalorder %s18, 0
      %p39 = por %p37, %p38
      %p40 = scmp.ne.s32.totalorder %s26, %s27
      %p41 = scmp.eq.s32.totalorder %s19, 1
      %p42 = por %p40, %p41
      %p44 = scmp.ne.s32.totalorder %s27, %s43
      %p45 = scmp.eq.s32.totalorder %s19, 0
      %p46 = por %p44, %p45
      %s47 = ssub.s32 %s13, %s20
      %p48 = scmp.eq.s32.totalorder %s47, 0
      %s50 = sadd.s32 %s49, 1
      %s51 = scalar_select %p48, %s49, %s50
      %p54 = pneg %p48
      %p55 = scmp.eq.s32.totalorder %s13, 1
      %p56 = por %p54, %p55
      %p57 = scmp.ne.s32.totalorder %s49, %s52
      %p58 = scmp.eq.s32.totalorder %s13, 0
      %p59 = por %p57, %p58
      %p60 = scmp.ne.s32.totalorder %s49, %s52
      %p61 = scmp.eq.s32.totalorder %s18, 1
      %p62 = por %p60, %p61
      %p63 = scmp.ne.s32.totalorder %s52, %s53
      %p64 = scmp.eq.s32.totalorder %s18, 0
      %p65 = por %p63, %p64
      %p66 = scmp.ne.s32.totalorder %s52, %s53
      %p67 = scmp.eq.s32.totalorder %s19, 1
      %p68 = por %p66, %p67
      %p70 = scmp.ne.s32.totalorder %s53, %s69
      %p71 = scmp.eq.s32.totalorder %s19, 0
      %p72 = por %p70, %p71
      %s74 = sadd.s32 %s73, 1
      %p77 = scmp.eq.s32.totalorder %s13, 1
      %p78 = scmp.ne.s32.totalorder %s73, %s75
      %p79 = scmp.eq.s32.totalorder %s13, 0
      %p80 = por %p78, %p79
      %p81 = scmp.ne.s32.totalorder %s73, %s75
      %p82 = scmp.eq.s32.totalorder %s18, 1
      %p83 = por %p81, %p82
      %p84 = scmp.ne.s32.totalorder %s75, %s76
      %p85 = scmp.eq.s32.totalorder %s18, 0
      %p86 = por %p84, %p85
      %p87 = scmp.ne.s32.totalorder %s75, %s76
      %p88 = scmp.eq.s32.totalorder %s19, 1
      %p89 = por %p87, %p88
      %p91 = scmp.ne.s32.totalorder %s76, %s90
      %p92 = scmp.eq.s32.totalorder %s19, 0
      %p93 = por %p91, %p92
      %s95 = sadd.s32 %s94, 1
      %p98 = scmp.eq.s32.totalorder %s13, 1
      %p99 = scmp.ne.s32.totalorder %s94, %s96
      %p100 = scmp.eq.s32.totalorder %s13, 0
      %p101 = por %p99, %p100
      %p102 = scmp.ne.s32.totalorder %s94, %s96
      %p103 = scmp.eq.s32.totalorder %s18, 1
      %p104 = por %p102, %p103
      %p105 = scmp.ne.s32.totalorder %s96, %s97
      %p106 = scmp.eq.s32.totalorder %s18, 0
      %p107 = por %p105, %p106
      %p108 = scmp.ne.s32.totalorder %s96, %s97
      %p109 = scmp.eq.s32.totalorder %s19, 1
      %p110 = por %p108, %p109
      %p112 = scmp.ne.s32.totalorder %s97, %s111
      %p113 = scmp.eq.s32.totalorder %s19, 0
      %p114 = por %p112, %p113
      %s115 = ssub.s32 %s13, %s20
      %p116 = scmp.eq.s32.totalorder %s115, 0
      %s118 = sadd.s32 %s117, 1
      %s119 = scalar_select %p116, %s117, %s118
      %p122 = pneg %p116
      %p123 = scmp.eq.s32.totalorder %s13, 1
      %p124 = por %p122, %p123
      %p125 = scmp.ne.s32.totalorder %s117, %s120
      %p126 = scmp.eq.s32.totalorder %s13, 0
      %p127 = por %p125, %p126
      %p128 = scmp.ne.s32.totalorder %s117, %s120
      %p129 = scmp.eq.s32.totalorder %s18, 1
      %p130 = por %p128, %p129
      %p131 = scmp.ne.s32.totalorder %s120, %s121
      %p132 = scmp.eq.s32.totalorder %s18, 0
      %p133 = por %p131, %p132
      %p134 = scmp.ne.s32.totalorder %s120, %s121
      %p135 = scmp.eq.s32.totalorder %s19, 1
      %p136 = por %p134, %p135
      %p138 = scmp.ne.s32.totalorder %s121, %s137
      %p139 = scmp.eq.s32.totalorder %s19, 0
      %p140 = por %p138, %p139
      %p141 = scmp.le.s32.totalorder 1, %s13
      %p142 = scmp.lt.s32.totalorder %s13, 3
      %p143 = pnand %p141, %p142
      %p144 = pneg %p143
      // Predicated region
      $region9: #{tpu_custom_call.1} parent=5 // pred_check
        _
      $region10: #{tpu_custom_call.1} parent=5 // pred_check_branch
        %146 = sbr.rel (%p143) target = $region12
      $region11: #{tpu_custom_call.1} parent=5 // pred_region
        %s147 = ssub.s32 %s13, 1
        // Predicated region
        $region13: #{tpu_custom_call.1} parent=11 // pred_check
          %p148 = pneg %p86
        $region14: #{tpu_custom_call.1} parent=11 // pred_check_branch
          %150 = sbr.rel (%p148) target = $region16
        $region15: #{tpu_custom_call.1} parent=11 // pred_region
          _
        $region16: #{tpu_custom_call.1} parent=11 // pred_fallthru
          _
        // Predicated region
        $region17: #{tpu_custom_call.1} parent=11 // pred_check
          %p151 = pneg %p107
        $region18: #{tpu_custom_call.1} parent=11 // pred_check_branch
          %153 = sbr.rel (%p151) target = $region20
        $region19: #{tpu_custom_call.1} parent=11 // pred_region
          _
        $region20: #{tpu_custom_call.1} parent=11 // pred_fallthru
          _
      $region12: #{tpu_custom_call.1} parent=5 // pred_fallthru
        _
      %p154 = scmp.lt.s32.totalorder %s13, 2
      // Predicated region
      $region21: #{tpu_custom_call.1} parent=5 // pred_check
        %p155 = pneg %p154
      $region22: #{tpu_custom_call.1} parent=5 // pred_check_branch
        %157 = sbr.rel (%p155) target = $region24
      $region23: #{tpu_custom_call.1} parent=5 // pred_region
        // Predicated region
        $region25: #{tpu_custom_call.1} parent=23 // pred_check
          %p158 = pneg %p33
        $region26: #{tpu_custom_call.1} parent=23 // pred_check_branch
          %160 = sbr.rel (%p158) target = $region28
        $region27: #{tpu_custom_call.1} parent=23 // pred_region
          %s161 = smul.u32 32, %s13
          %p162 = scmp.lt.s32.totalorder %s161, 63
          %s163 = scalar_select %p162, %s161, 63
          %s164 = smul.addr %s163, 8
          %s165 = scalar_lea.vmem %s0, %s164
          %s166 = smul.u32 32, %s13
        $region28: #{tpu_custom_call.1} parent=23 // pred_fallthru
          _
        // Predicated region
        $region29: #{tpu_custom_call.1} parent=23 // pred_check
          %p167 = pneg %p59
        $region30: #{tpu_custom_call.1} parent=23 // pred_check_branch
          %169 = sbr.rel (%p167) target = $region32
        $region31: #{tpu_custom_call.1} parent=23 // pred_region
          %s170 = smul.u32 32, %s13
          %p171 = scmp.lt.s32.totalorder %s170, 63
          %s172 = scalar_select %p171, %s170, 63
          %s173 = smul.addr %s172, 8
          %s174 = scalar_lea.vmem %s1, %s173
          %s175 = smul.u32 32, %s13
        $region32: #{tpu_custom_call.1} parent=23 // pred_fallthru
          _
      $region24: #{tpu_custom_call.1} parent=5 // pred_fallthru
        _
      %p176 = scmp.le.s32.totalorder 1, %s13
      %p177 = scmp.lt.s32.totalorder %s13, 3
      %p178 = pnand %p176, %p177
      %p179 = pneg %p178
      // Predicated region
      $region33: #{tpu_custom_call.1} parent=5 // pred_check
        _
      $region34: #{tpu_custom_call.1} parent=5 // pred_check_branch
        %181 = sbr.rel (%p178) target = $region36
      $region35: #{tpu_custom_call.1} parent=5 // pred_region
        %s182 = ssub.s32 %s13, 1
        %s183 = smul.u32 32, %s18
        %p184 = scmp.lt.s32.totalorder %s183, 63
        %s185 = scalar_select %p184, %s183, 63
        %s186 = smul.addr %s185, 8
        %s187 = scalar_lea.vmem %s0, %s186
        %p188 = pneg %p39
        %p189 = pneg %p36
        %s190 = smul.u32 32, %s18
        %p191 = scmp.lt.s32.totalorder %s190, 63
        %s192 = scalar_select %p191, %s190, 63
        %s193 = smul.addr %s192, 8
        %s194 = scalar_lea.vmem %s1, %s193
        %p195 = pneg %p65
        %p196 = pneg %p62
        %p197 = pneg %p86
        %p198 = pneg %p83
        %p199 = pneg %p107
        %p200 = pneg %p104
        %p201 = pneg %p133
        %p202 = pneg %p130
        %s203 = sand.u32 %s120, 1
        %s204 = scalar_lea.sflag [#allocation3], %s203
        %s205 = sand.u32 %s120, 1
        %s206 = smul.addr %s205, 256
        %s207 = scalar_lea.vmem [#allocation2], %s206
        %s208 = smul.u32 32, %s18
        %p209 = scmp.lt.s32.totalorder %s208, 63
        %s210 = scalar_select %p209, %s208, 63
        %s211 = smul.addr %s210, 8
        %s212 = scalar_lea.vmem %s0, %s211
        %s213 = smul.u32 32, %s18
        %s214 = smul.u32 32, %s18
        %p215 = scmp.lt.s32.totalorder %s214, 63
        %s216 = scalar_select %p215, %s214, 63
        %s217 = smul.addr %s216, 8
        %s218 = scalar_lea.vmem %s1, %s217
        %s219 = smul.u32 32, %s18
        %s220 = smul.u32 32, %s18
        %v221 = vld [vmem:[%s212] sm:$0xff]
        %v222 = vld [vmem:[%s212 + $0x8] sm:$0xff]
        %v223 = vld [vmem:[%s212 + $0x10] sm:$0xff]
        %v224 = vld [vmem:[%s212 + $0x18] sm:$0xff]
        %v225 = vld [vmem:[%s212 + $0x20] sm:$0xff]
        %v226 = vld [vmem:[%s212 + $0x28] sm:$0xff]
        %v227 = vld [vmem:[%s212 + $0x30] sm:$0xff]
        %v228 = vld [vmem:[%s212 + $0x38] sm:$0xff]
        %v229 = vld [vmem:[%s212 + $0x40] sm:$0xff]
        %v230 = vld [vmem:[%s212 + $0x48] sm:$0xff]
        %v231 = vld [vmem:[%s212 + $0x50] sm:$0xff]
        %v232 = vld [vmem:[%s212 + $0x58] sm:$0xff]
        %v233 = vld [vmem:[%s212 + $0x60] sm:$0xff]
        %v234 = vld [vmem:[%s212 + $0x68] sm:$0xff]
        %v235 = vld [vmem:[%s212 + $0x70] sm:$0xff]
        %v236 = vld [vmem:[%s212 + $0x78] sm:$0xff]
        %v237 = vld [vmem:[%s212 + $0x80] sm:$0xff]
        %v238 = vld [vmem:[%s212 + $0x88] sm:$0xff]
        %v239 = vld [vmem:[%s212 + $0x90] sm:$0xff]
        %v240 = vld [vmem:[%s212 + $0x98] sm:$0xff]
        %v241 = vld [vmem:[%s212 + $0xa0] sm:$0xff]
        %v242 = vld [vmem:[%s212 + $0xa8] sm:$0xff]
        %v243 = vld [vmem:[%s212 + $0xb0] sm:$0xff]
        %v244 = vld [vmem:[%s212 + $0xb8] sm:$0xff]
        %v245 = vld [vmem:[%s212 + $0xc0] sm:$0xff]
        %v246 = vld [vmem:[%s212 + $0xc8] sm:$0xff]
        %v247 = vld [vmem:[%s212 + $0xd0] sm:$0xff]
        %v248 = vld [vmem:[%s212 + $0xd8] sm:$0xff]
        %v249 = vld [vmem:[%s212 + $0xe0] sm:$0xff]
        %v250 = vld [vmem:[%s212 + $0xe8] sm:$0xff]
        %v251 = vld [vmem:[%s212 + $0xf0] sm:$0xff]
        %v252 = vld [vmem:[%s212 + $0xf8] sm:$0xff]
        %v253 = vld [vmem:[%s2] sm:$0xff]
        %v254 = vld [vmem:[%s2 + $0x8] sm:$0xff]
        %v255 = vld [vmem:[%s218] sm:$0xff]
        %v256 = vld [vmem:[%s218 + $0x8] sm:$0xff]
        %v257 = vld [vmem:[%s218 + $0x10] sm:$0xff]
        %v258 = vld [vmem:[%s218 + $0x18] sm:$0xff]
        %v259 = vld [vmem:[%s218 + $0x20] sm:$0xff]
        %v260 = vld [vmem:[%s218 + $0x28] sm:$0xff]
        %v261 = vld [vmem:[%s218 + $0x30] sm:$0xff]
        %v262 = vld [vmem:[%s218 + $0x38] sm:$0xff]
        %v263 = vld [vmem:[%s218 + $0x40] sm:$0xff]
        %v264 = vld [vmem:[%s218 + $0x48] sm:$0xff]
        %v265 = vld [vmem:[%s218 + $0x50] sm:$0xff]
        %v266 = vld [vmem:[%s218 + $0x58] sm:$0xff]
        %v267 = vld [vmem:[%s218 + $0x60] sm:$0xff]
        %v268 = vld [vmem:[%s218 + $0x68] sm:$0xff]
        %v269 = vld [vmem:[%s218 + $0x70] sm:$0xff]
        %v270 = vld [vmem:[%s218 + $0x78] sm:$0xff]
        %v271 = vld [vmem:[%s218 + $0x80] sm:$0xff]
        %v272 = vld [vmem:[%s218 + $0x88] sm:$0xff]
        %v273 = vld [vmem:[%s218 + $0x90] sm:$0xff]
        %v274 = vld [vmem:[%s218 + $0x98] sm:$0xff]
        %v275 = vld [vmem:[%s218 + $0xa0] sm:$0xff]
        %v276 = vld [vmem:[%s218 + $0xa8] sm:$0xff]
        %v277 = vld [vmem:[%s218 + $0xb0] sm:$0xff]
        %v278 = vld [vmem:[%s218 + $0xb8] sm:$0xff]
        %v279 = vld [vmem:[%s218 + $0xc0] sm:$0xff]
        %v280 = vld [vmem:[%s218 + $0xc8] sm:$0xff]
        %v281 = vld [vmem:[%s218 + $0xd0] sm:$0xff]
        %v282 = vld [vmem:[%s218 + $0xd8] sm:$0xff]
        %v283 = vld [vmem:[%s218 + $0xe0] sm:$0xff]
        %v284 = vld [vmem:[%s218 + $0xe8] sm:$0xff]
        %v285 = vld [vmem:[%s218 + $0xf0] sm:$0xff]
        %v286 = vld [vmem:[%s218 + $0xf8] sm:$0xff]
        %v287 = vld [vmem:[%s3] sm:$0xff]
        %v288 = vld [vmem:[%s3 + $0x8] sm:$0xff]
        %vm289 = vcmask 130048
        %v291 = vsel %vm289, %v255, 0
        %v294 = vsel %vm289, %v256, 0
        %v297 = vsel %vm289, %v257, 0
        %v300 = vsel %vm289, %v258, 0
        %v303 = vsel %vm289, %v259, 0
        %v306 = vsel %vm289, %v260, 0
        %v309 = vsel %vm289, %v261, 0
        %v312 = vsel %vm289, %v262, 0
        %v315 = vsel %vm289, %v263, 0
        %v318 = vsel %vm289, %v264, 0
        %v321 = vsel %vm289, %v265, 0
        %v324 = vsel %vm289, %v266, 0
        %v327 = vsel %vm289, %v267, 0
        %v330 = vsel %vm289, %v268, 0
        %v333 = vsel %vm289, %v269, 0
        %v336 = vsel %vm289, %v270, 0
        %v339 = vsel %vm289, %v271, 0
        %v342 = vsel %vm289, %v272, 0
        %v345 = vsel %vm289, %v273, 0
        %v348 = vsel %vm289, %v274, 0
        %v351 = vsel %vm289, %v275, 0
        %v354 = vsel %vm289, %v276, 0
        %v357 = vsel %vm289, %v277, 0
        %v360 = vsel %vm289, %v278, 0
        %v363 = vsel %vm289, %v279, 0
        %v366 = vsel %vm289, %v280, 0
        %v369 = vsel %vm289, %v281, 0
        %v372 = vsel %vm289, %v282, 0
        %v375 = vsel %vm289, %v283, 0
        %v378 = vsel %vm289, %v284, 0
        %v381 = vsel %vm289, %v285, 0
        %v384 = vsel %vm289, %v286, 0
        %386 = vmatprep.subr.mxu0 0.0
        %387 = vmatpush1.msra.mxu0 0.0
        %388 = vmatprep.subr.mxu0 0.0
        %389 = vmatpush1.msra.mxu0 0.0
        %390 = vmatprep.subr.mxu0 0.0
        %391 = vmatpush1.msra.mxu0 0.0
        %392 = vmatprep.subr.mxu0 0.0
        %393 = vmatpush1.msra.mxu0 0.0
        %394 = vmatprep.subr.mxu0 0.0
        %395 = vmatpush1.msra.mxu0 0.0
        %396 = vmatprep.subr.mxu0 0.0
        %397 = vmatpush1.msra.mxu0 0.0
        %398 = vmatprep.subr.mxu0 0.0
        %399 = vmatpush1.msra.mxu0 0.0
        %400 = vmatprep.subr.mxu0 0.0
        %401 = vmatpush1.msra.mxu0 0.0
        %402 = vmatprep.subr.mxu0 0.0
        %403 = vmatpush1.msra.mxu0 0.0
        %404 = vmatprep.subr.mxu0 0.0
        %405 = vmatpush1.msra.mxu0 0.0
        %406 = vmatprep.subr.mxu0 0.0
        %407 = vmatpush1.msra.mxu0 0.0
        %408 = vmatprep.subr.mxu0 0.0
        %409 = vmatpush1.msra.mxu0 0.0
        %410 = vmatprep.subr.mxu0 0.0
        %411 = vmatpush1.msra.mxu0 0.0
        %412 = vmatprep.subr.mxu0 0.0
        %413 = vmatpush1.msra.mxu0 0.0
        %414 = vmatprep.subr.mxu0 0.0
        %415 = vmatpush1.msra.mxu0 %v288
        %416 = vmatprep.subr.mxu0 0.0
        %417 = vmatpush1.msra.mxu0 %v287
        %418 = vmatprep.subr.mxu0 0.0
        %419 = vmatpush2.msra.mxu0 0.0
        %420 = vmatprep.subr.mxu0 0.0
        %421 = vmatpush2.msra.mxu0 0.0
        %422 = vmatprep.subr.mxu0 0.0
        %423 = vmatpush2.msra.mxu0 0.0
        %424 = vmatprep.subr.mxu0 0.0
        %425 = vmatpush2.msra.mxu0 0.0
        %426 = vmatprep.subr.mxu0 0.0
        %427 = vmatpush2.msra.mxu0 0.0
        %428 = vmatprep.subr.mxu0 0.0
        %429 = vmatpush2.msra.mxu0 0.0
        %430 = vmatprep.subr.mxu0 0.0
        %431 = vmatpush2.msra.mxu0 0.0
        %432 = vmatprep.subr.mxu0 0.0
        %433 = vmatpush2.msra.mxu0 0.0
        %434 = vmatprep.subr.mxu0 0.0
        %435 = vmatpush2.msra.mxu0 0.0
        %436 = vmatprep.subr.mxu0 0.0
        %437 = vmatpush2.msra.mxu0 0.0
        %438 = vmatprep.subr.mxu0 0.0
        %439 = vmatpush2.msra.mxu0 0.0
        %440 = vmatprep.subr.mxu0 0.0
        %441 = vmatpush2.msra.mxu0 0.0
        %442 = vmatprep.subr.mxu0 0.0
        %443 = vmatpush2.msra.mxu0 0.0
        %444 = vmatprep.subr.mxu0 0.0
        %445 = vmatpush2.msra.mxu0 0.0
        %446 = vmatprep.subr.mxu0 0.0
        %447 = vmatpush2.msra.mxu0 0.0
        %448 = vmatprep.subr.mxu0 0.0
        %449 = vmatpush2.msra.mxu0 0.0
        %450 = vmatprep.mubr.f32.mxu0 0.0
        %451 = vmatmul.mubr.f32.gmra.mxu0 %v291
        %v452 = vpop.f32.mrf.mxu0
        %v453 = vadd.f32 0.0, %v452
        %v454 = vpop.f32.mrf.mxu0
        %455 = vmatprep.mubr.f32.mxu0 0.0
        %456 = vmatmul.mubr.f32.gmra.mxu0 %v294
        %v457 = vpop.f32.mrf.mxu0
        %v458 = vadd.f32 0.0, %v457
        %v459 = vpop.f32.mrf.mxu0
        %460 = vmatprep.mubr.f32.mxu0 0.0
        %461 = vmatmul.mubr.f32.gmra.mxu0 %v297
        %v462 = vpop.f32.mrf.mxu0
        %v463 = vadd.f32 0.0, %v462
        %v464 = vpop.f32.mrf.mxu0
        %465 = vmatprep.mubr.f32.mxu0 0.0
        %466 = vmatmul.mubr.f32.gmra.mxu0 %v300
        %v467 = vpop.f32.mrf.mxu0
        %v468 = vadd.f32 0.0, %v467
        %v469 = vpop.f32.mrf.mxu0
        %470 = vmatprep.mubr.f32.mxu0 0.0
        %471 = vmatmul.mubr.f32.gmra.mxu0 %v303
        %v472 = vpop.f32.mrf.mxu0
        %v473 = vadd.f32 0.0, %v472
        %v474 = vpop.f32.mrf.mxu0
        %475 = vmatprep.mubr.f32.mxu0 0.0
        %476 = vmatmul.mubr.f32.gmra.mxu0 %v306
        %v477 = vpop.f32.mrf.mxu0
        %v478 = vadd.f32 0.0, %v477
        %v479 = vpop.f32.mrf.mxu0
        %480 = vmatprep.mubr.f32.mxu0 0.0
        %481 = vmatmul.mubr.f32.gmra.mxu0 %v309
        %v482 = vpop.f32.mrf.mxu0
        %v483 = vadd.f32 0.0, %v482
        %v484 = vpop.f32.mrf.mxu0
        %485 = vmatprep.mubr.f32.mxu0 0.0
        %486 = vmatmul.mubr.f32.gmra.mxu0 %v312
        %v487 = vpop.f32.mrf.mxu0
        %v488 = vadd.f32 0.0, %v487
        %v489 = vpop.f32.mrf.mxu0
        %490 = vmatprep.mubr.f32.mxu0 0.0
        %491 = vmatmul.mubr.f32.gmra.mxu0 %v315
        %v492 = vpop.f32.mrf.mxu0
        %v493 = vadd.f32 0.0, %v492
        %v494 = vpop.f32.mrf.mxu0
        %495 = vmatprep.mubr.f32.mxu0 0.0
        %496 = vmatmul.mubr.f32.gmra.mxu0 %v318
        %v497 = vpop.f32.mrf.mxu0
        %v498 = vadd.f32 0.0, %v497
        %v499 = vpop.f32.mrf.mxu0
        %500 = vmatprep.mubr.f32.mxu0 0.0
        %501 = vmatmul.mubr.f32.gmra.mxu0 %v321
        %v502 = vpop.f32.mrf.mxu0
        %v503 = vadd.f32 0.0, %v502
        %v504 = vpop.f32.mrf.mxu0
        %505 = vmatprep.mubr.f32.mxu0 0.0
        %506 = vmatmul.mubr.f32.gmra.mxu0 %v324
        %v507 = vpop.f32.mrf.mxu0
        %v508 = vadd.f32 0.0, %v507
        %v509 = vpop.f32.mrf.mxu0
        %510 = vmatprep.mubr.f32.mxu0 0.0
        %511 = vmatmul.mubr.f32.gmra.mxu0 %v327
        %v512 = vpop.f32.mrf.mxu0
        %v513 = vadd.f32 0.0, %v512
        %v514 = vpop.f32.mrf.mxu0
        %515 = vmatprep.mubr.f32.mxu0 0.0
        %516 = vmatmul.mubr.f32.gmra.mxu0 %v330
        %v517 = vpop.f32.mrf.mxu0
        %v518 = vadd.f32 0.0, %v517
        %v519 = vpop.f32.mrf.mxu0
        %520 = vmatprep.mubr.f32.mxu0 0.0
        %521 = vmatmul.mubr.f32.gmra.mxu0 %v333
        %v522 = vpop.f32.mrf.mxu0
        %v523 = vadd.f32 0.0, %v522
        %v524 = vpop.f32.mrf.mxu0
        %525 = vmatprep.mubr.f32.mxu0 0.0
        %526 = vmatmul.mubr.f32.gmra.mxu0 %v336
        %v527 = vpop.f32.mrf.mxu0
        %v528 = vadd.f32 0.0, %v527
        %v529 = vpop.f32.mrf.mxu0
        %530 = vmatprep.mubr.f32.mxu0 0.0
        %531 = vmatmul.mubr.f32.gmra.mxu0 %v339
        %v532 = vpop.f32.mrf.mxu0
        %v533 = vadd.f32 0.0, %v532
        %v534 = vpop.f32.mrf.mxu0
        %535 = vmatprep.mubr.f32.mxu0 0.0
        %536 = vmatmul.mubr.f32.gmra.mxu0 %v342
        %v537 = vpop.f32.mrf.mxu0
        %v538 = vadd.f32 0.0, %v537
        %v539 = vpop.f32.mrf.mxu0
        %540 = vmatprep.mubr.f32.mxu0 0.0
        %541 = vmatmul.mubr.f32.gmra.mxu0 %v345
        %v542 = vpop.f32.mrf.mxu0
        %v543 = vadd.f32 0.0, %v542
        %v544 = vpop.f32.mrf.mxu0
        %545 = vmatprep.mubr.f32.mxu0 0.0
        %546 = vmatmul.mubr.f32.gmra.mxu0 %v348
        %v547 = vpop.f32.mrf.mxu0
        %v548 = vadd.f32 0.0, %v547
        %v549 = vpop.f32.mrf.mxu0
        %550 = vmatprep.mubr.f32.mxu0 0.0
        %551 = vmatmul.mubr.f32.gmra.mxu0 %v351
        %v552 = vpop.f32.mrf.mxu0
        %v553 = vadd.f32 0.0, %v552
        %v554 = vpop.f32.mrf.mxu0
        %555 = vmatprep.mubr.f32.mxu0 0.0
        %556 = vmatmul.mubr.f32.gmra.mxu0 %v354
        %v557 = vpop.f32.mrf.mxu0
        %v558 = vadd.f32 0.0, %v557
        %v559 = vpop.f32.mrf.mxu0
        %560 = vmatprep.mubr.f32.mxu0 0.0
        %561 = vmatmul.mubr.f32.gmra.mxu0 %v357
        %v562 = vpop.f32.mrf.mxu0
        %v563 = vadd.f32 0.0, %v562
        %v564 = vpop.f32.mrf.mxu0
        %565 = vmatprep.mubr.f32.mxu0 0.0
        %566 = vmatmul.mubr.f32.gmra.mxu0 %v360
        %v567 = vpop.f32.mrf.mxu0
        %v568 = vadd.f32 0.0, %v567
        %v569 = vpop.f32.mrf.mxu0
        %570 = vmatprep.mubr.f32.mxu0 0.0
        %571 = vmatmul.mubr.f32.gmra.mxu0 %v363
        %v572 = vpop.f32.mrf.mxu0
        %v573 = vadd.f32 0.0, %v572
        %v574 = vpop.f32.mrf.mxu0
        %575 = vmatprep.mubr.f32.mxu0 0.0
        %576 = vmatmul.mubr.f32.gmra.mxu0 %v366
        %v577 = vpop.f32.mrf.mxu0
        %v578 = vadd.f32 0.0, %v577
        %v579 = vpop.f32.mrf.mxu0
        %580 = vmatprep.mubr.f32.mxu0 0.0
        %581 = vmatmul.mubr.f32.gmra.mxu0 %v369
        %v582 = vpop.f32.mrf.mxu0
        %v583 = vadd.f32 0.0, %v582
        %v584 = vpop.f32.mrf.mxu0
        %585 = vmatprep.mubr.f32.mxu0 0.0
        %586 = vmatmul.mubr.f32.gmra.mxu0 %v372
        %v587 = vpop.f32.mrf.mxu0
        %v588 = vadd.f32 0.0, %v587
        %v589 = vpop.f32.mrf.mxu0
        %590 = vmatprep.mubr.f32.mxu0 0.0
        %591 = vmatmul.mubr.f32.gmra.mxu0 %v375
        %v592 = vpop.f32.mrf.mxu0
        %v593 = vadd.f32 0.0, %v592
        %v594 = vpop.f32.mrf.mxu0
        %595 = vmatprep.mubr.f32.mxu0 0.0
        %596 = vmatmul.mubr.f32.gmra.mxu0 %v378
        %v597 = vpop.f32.mrf.mxu0
        %v598 = vadd.f32 0.0, %v597
        %v599 = vpop.f32.mrf.mxu0
        %600 = vmatprep.mubr.f32.mxu0 0.0
        %601 = vmatmul.mubr.f32.gmra.mxu0 %v381
        %v602 = vpop.f32.mrf.mxu0
        %v603 = vadd.f32 0.0, %v602
        %v604 = vpop.f32.mrf.mxu0
        %605 = vmatprep.mubr.f32.mxu0 0.0
        %606 = vmatmul.mubr.f32.gmra.mxu0 %v384
        %v607 = vpop.f32.mrf.mxu0
        %v608 = vadd.f32 0.0, %v607
        %v609 = vpop.f32.mrf.mxu0
        %610 = vdwg.mxu0
        %v612 = vsel %vm289, %v221, 0
        %v615 = vsel %vm289, %v222, 0
        %v618 = vsel %vm289, %v223, 0
        %v621 = vsel %vm289, %v224, 0
        %v624 = vsel %vm289, %v225, 0
        %v627 = vsel %vm289, %v226, 0
        %v630 = vsel %vm289, %v227, 0
        %v633 = vsel %vm289, %v228, 0
        %v636 = vsel %vm289, %v229, 0
        %v639 = vsel %vm289, %v230, 0
        %v642 = vsel %vm289, %v231, 0
        %v645 = vsel %vm289, %v232, 0
        %v648 = vsel %vm289, %v233, 0
        %v651 = vsel %vm289, %v234, 0
        %v654 = vsel %vm289, %v235, 0
        %v657 = vsel %vm289, %v236, 0
        %v660 = vsel %vm289, %v237, 0
        %v663 = vsel %vm289, %v238, 0
        %v666 = vsel %vm289, %v239, 0
        %v669 = vsel %vm289, %v240, 0
        %v672 = vsel %vm289, %v241, 0
        %v675 = vsel %vm289, %v242, 0
        %v678 = vsel %vm289, %v243, 0
        %v681 = vsel %vm289, %v244, 0
        %v684 = vsel %vm289, %v245, 0
        %v687 = vsel %vm289, %v246, 0
        %v690 = vsel %vm289, %v247, 0
        %v693 = vsel %vm289, %v248, 0
        %v696 = vsel %vm289, %v249, 0
        %v699 = vsel %vm289, %v250, 0
        %v702 = vsel %vm289, %v251, 0
        %v705 = vsel %vm289, %v252, 0
        %707 = vmatprep.subr.mxu0 0.0
        %708 = vmatpush1.msra.mxu0 0.0
        %709 = vmatprep.subr.mxu0 0.0
        %710 = vmatpush1.msra.mxu0 0.0
        %711 = vmatprep.subr.mxu0 0.0
        %712 = vmatpush1.msra.mxu0 0.0
        %713 = vmatprep.subr.mxu0 0.0
        %714 = vmatpush1.msra.mxu0 0.0
        %715 = vmatprep.subr.mxu0 0.0
        %716 = vmatpush1.msra.mxu0 0.0
        %717 = vmatprep.subr.mxu0 0.0
        %718 = vmatpush1.msra.mxu0 0.0
        %719 = vmatprep.subr.mxu0 0.0
        %720 = vmatpush1.msra.mxu0 0.0
        %721 = vmatprep.subr.mxu0 0.0
        %722 = vmatpush1.msra.mxu0 0.0
        %723 = vmatprep.subr.mxu0 0.0
        %724 = vmatpush1.msra.mxu0 0.0
        %725 = vmatprep.subr.mxu0 0.0
        %726 = vmatpush1.msra.mxu0 0.0
        %727 = vmatprep.subr.mxu0 0.0
        %728 = vmatpush1.msra.mxu0 0.0
        %729 = vmatprep.subr.mxu0 0.0
        %730 = vmatpush1.msra.mxu0 0.0
        %731 = vmatprep.subr.mxu0 0.0
        %732 = vmatpush1.msra.mxu0 0.0
        %733 = vmatprep.subr.mxu0 0.0
        %734 = vmatpush1.msra.mxu0 0.0
        %735 = vmatprep.subr.mxu0 0.0
        %736 = vmatpush1.msra.mxu0 %v254
        %737 = vmatprep.subr.mxu0 0.0
        %738 = vmatpush1.msra.mxu0 %v253
        %739 = vmatprep.subr.mxu0 0.0
        %740 = vmatpush2.msra.mxu0 0.0
        %741 = vmatprep.subr.mxu0 0.0
        %742 = vmatpush2.msra.mxu0 0.0
        %743 = vmatprep.subr.mxu0 0.0
        %744 = vmatpush2.msra.mxu0 0.0
        %745 = vmatprep.subr.mxu0 0.0
        %746 = vmatpush2.msra.mxu0 0.0
        %747 = vmatprep.subr.mxu0 0.0
        %748 = vmatpush2.msra.mxu0 0.0
        %749 = vmatprep.subr.mxu0 0.0
        %750 = vmatpush2.msra.mxu0 0.0
        %751 = vmatprep.subr.mxu0 0.0
        %752 = vmatpush2.msra.mxu0 0.0
        %753 = vmatprep.subr.mxu0 0.0
        %754 = vmatpush2.msra.mxu0 0.0
        %755 = vmatprep.subr.mxu0 0.0
        %756 = vmatpush2.msra.mxu0 0.0
        %757 = vmatprep.subr.mxu0 0.0
        %758 = vmatpush2.msra.mxu0 0.0
        %759 = vmatprep.subr.mxu0 0.0
        %760 = vmatpush2.msra.mxu0 0.0
        %761 = vmatprep.subr.mxu0 0.0
        %762 = vmatpush2.msra.mxu0 0.0
        %763 = vmatprep.subr.mxu0 0.0
        %764 = vmatpush2.msra.mxu0 0.0
        %765 = vmatprep.subr.mxu0 0.0
        %766 = vmatpush2.msra.mxu0 0.0
        %767 = vmatprep.subr.mxu0 0.0
        %768 = vmatpush2.msra.mxu0 0.0
        %769 = vmatprep.subr.mxu0 0.0
        %770 = vmatpush2.msra.mxu0 0.0
        %771 = vmatprep.mubr.f32.mxu0 0.0
        %772 = vmatmul.mubr.f32.gmra.mxu0 %v612
        %v773 = vpop.f32.mrf.mxu0
        %v774 = vadd.f32 %v453, %v773
        %v775 = vpop.f32.mrf.mxu0
        %776 = vmatprep.mubr.f32.mxu0 0.0
        %777 = vmatmul.mubr.f32.gmra.mxu0 %v615
        %v778 = vpop.f32.mrf.mxu0
        %v779 = vadd.f32 %v458, %v778
        %v780 = vpop.f32.mrf.mxu0
        %781 = vmatprep.mubr.f32.mxu0 0.0
        %782 = vmatmul.mubr.f32.gmra.mxu0 %v618
        %v783 = vpop.f32.mrf.mxu0
        %v784 = vadd.f32 %v463, %v783
        %v785 = vpop.f32.mrf.mxu0
        %786 = vmatprep.mubr.f32.mxu0 0.0
        %787 = vmatmul.mubr.f32.gmra.mxu0 %v621
        %v788 = vpop.f32.mrf.mxu0
        %v789 = vadd.f32 %v468, %v788
        %v790 = vpop.f32.mrf.mxu0
        %791 = vmatprep.mubr.f32.mxu0 0.0
        %792 = vmatmul.mubr.f32.gmra.mxu0 %v624
        %v793 = vpop.f32.mrf.mxu0
        %v794 = vadd.f32 %v473, %v793
        %v795 = vpop.f32.mrf.mxu0
        %796 = vmatprep.mubr.f32.mxu0 0.0
        %797 = vmatmul.mubr.f32.gmra.mxu0 %v627
        %v798 = vpop.f32.mrf.mxu0
        %v799 = vadd.f32 %v478, %v798
        %v800 = vpop.f32.mrf.mxu0
        %801 = vmatprep.mubr.f32.mxu0 0.0
        %802 = vmatmul.mubr.f32.gmra.mxu0 %v630
        %v803 = vpop.f32.mrf.mxu0
        %v804 = vadd.f32 %v483, %v803
        %v805 = vpop.f32.mrf.mxu0
        %806 = vmatprep.mubr.f32.mxu0 0.0
        %807 = vmatmul.mubr.f32.gmra.mxu0 %v633
        %v808 = vpop.f32.mrf.mxu0
        %v809 = vadd.f32 %v488, %v808
        %v810 = vpop.f32.mrf.mxu0
        %811 = vmatprep.mubr.f32.mxu0 0.0
        %812 = vmatmul.mubr.f32.gmra.mxu0 %v636
        %v813 = vpop.f32.mrf.mxu0
        %v814 = vadd.f32 %v493, %v813
        %v815 = vpop.f32.mrf.mxu0
        %816 = vmatprep.mubr.f32.mxu0 0.0
        %817 = vmatmul.mubr.f32.gmra.mxu0 %v639
        %v818 = vpop.f32.mrf.mxu0
        %v819 = vadd.f32 %v498, %v818
        %v820 = vpop.f32.mrf.mxu0
        %821 = vmatprep.mubr.f32.mxu0 0.0
        %822 = vmatmul.mubr.f32.gmra.mxu0 %v642
        %v823 = vpop.f32.mrf.mxu0
        %v824 = vadd.f32 %v503, %v823
        %v825 = vpop.f32.mrf.mxu0
        %826 = vmatprep.mubr.f32.mxu0 0.0
        %827 = vmatmul.mubr.f32.gmra.mxu0 %v645
        %v828 = vpop.f32.mrf.mxu0
        %v829 = vadd.f32 %v508, %v828
        %v830 = vpop.f32.mrf.mxu0
        %831 = vmatprep.mubr.f32.mxu0 0.0
        %832 = vmatmul.mubr.f32.gmra.mxu0 %v648
        %v833 = vpop.f32.mrf.mxu0
        %v834 = vadd.f32 %v513, %v833
        %v835 = vpop.f32.mrf.mxu0
        %836 = vmatprep.mubr.f32.mxu0 0.0
        %837 = vmatmul.mubr.f32.gmra.mxu0 %v651
        %v838 = vpop.f32.mrf.mxu0
        %v839 = vadd.f32 %v518, %v838
        %v840 = vpop.f32.mrf.mxu0
        %841 = vmatprep.mubr.f32.mxu0 0.0
        %842 = vmatmul.mubr.f32.gmra.mxu0 %v654
        %v843 = vpop.f32.mrf.mxu0
        %v844 = vadd.f32 %v523, %v843
        %v845 = vpop.f32.mrf.mxu0
        %846 = vmatprep.mubr.f32.mxu0 0.0
        %847 = vmatmul.mubr.f32.gmra.mxu0 %v657
        %v848 = vpop.f32.mrf.mxu0
        %v849 = vadd.f32 %v528, %v848
        %v850 = vpop.f32.mrf.mxu0
        %851 = vmatprep.mubr.f32.mxu0 0.0
        %852 = vmatmul.mubr.f32.gmra.mxu0 %v660
        %v853 = vpop.f32.mrf.mxu0
        %v854 = vadd.f32 %v533, %v853
        %v855 = vpop.f32.mrf.mxu0
        %856 = vmatprep.mubr.f32.mxu0 0.0
        %857 = vmatmul.mubr.f32.gmra.mxu0 %v663
        %v858 = vpop.f32.mrf.mxu0
        %v859 = vadd.f32 %v538, %v858
        %v860 = vpop.f32.mrf.mxu0
        %861 = vmatprep.mubr.f32.mxu0 0.0
        %862 = vmatmul.mubr.f32.gmra.mxu0 %v666
        %v863 = vpop.f32.mrf.mxu0
        %v864 = vadd.f32 %v543, %v863
        %v865 = vpop.f32.mrf.mxu0
        %866 = vmatprep.mubr.f32.mxu0 0.0
        %867 = vmatmul.mubr.f32.gmra.mxu0 %v669
        %v868 = vpop.f32.mrf.mxu0
        %v869 = vadd.f32 %v548, %v868
        %v870 = vpop.f32.mrf.mxu0
        %871 = vmatprep.mubr.f32.mxu0 0.0
        %872 = vmatmul.mubr.f32.gmra.mxu0 %v672
        %v873 = vpop.f32.mrf.mxu0
        %v874 = vadd.f32 %v553, %v873
        %v875 = vpop.f32.mrf.mxu0
        %876 = vmatprep.mubr.f32.mxu0 0.0
        %877 = vmatmul.mubr.f32.gmra.mxu0 %v675
        %v878 = vpop.f32.mrf.mxu0
        %v879 = vadd.f32 %v558, %v878
        %v880 = vpop.f32.mrf.mxu0
        %881 = vmatprep.mubr.f32.mxu0 0.0
        %882 = vmatmul.mubr.f32.gmra.mxu0 %v678
        %v883 = vpop.f32.mrf.mxu0
        %v884 = vadd.f32 %v563, %v883
        %v885 = vpop.f32.mrf.mxu0
        %886 = vmatprep.mubr.f32.mxu0 0.0
        %887 = vmatmul.mubr.f32.gmra.mxu0 %v681
        %v888 = vpop.f32.mrf.mxu0
        %v889 = vadd.f32 %v568, %v888
        %v890 = vpop.f32.mrf.mxu0
        %891 = vmatprep.mubr.f32.mxu0 0.0
        %892 = vmatmul.mubr.f32.gmra.mxu0 %v684
        %v893 = vpop.f32.mrf.mxu0
        %v894 = vadd.f32 %v573, %v893
        %v895 = vpop.f32.mrf.mxu0
        %896 = vmatprep.mubr.f32.mxu0 0.0
        %897 = vmatmul.mubr.f32.gmra.mxu0 %v687
        %v898 = vpop.f32.mrf.mxu0
        %v899 = vadd.f32 %v578, %v898
        %v900 = vpop.f32.mrf.mxu0
        %901 = vmatprep.mubr.f32.mxu0 0.0
        %902 = vmatmul.mubr.f32.gmra.mxu0 %v690
        %v903 = vpop.f32.mrf.mxu0
        %v904 = vadd.f32 %v583, %v903
        %v905 = vpop.f32.mrf.mxu0
        %906 = vmatprep.mubr.f32.mxu0 0.0
        %907 = vmatmul.mubr.f32.gmra.mxu0 %v693
        %v908 = vpop.f32.mrf.mxu0
        %v909 = vadd.f32 %v588, %v908
        %v910 = vpop.f32.mrf.mxu0
        %911 = vmatprep.mubr.f32.mxu0 0.0
        %912 = vmatmul.mubr.f32.gmra.mxu0 %v696
        %v913 = vpop.f32.mrf.mxu0
        %v914 = vadd.f32 %v593, %v913
        %v915 = vpop.f32.mrf.mxu0
        %916 = vmatprep.mubr.f32.mxu0 0.0
        %917 = vmatmul.mubr.f32.gmra.mxu0 %v699
        %v918 = vpop.f32.mrf.mxu0
        %v919 = vadd.f32 %v598, %v918
        %v920 = vpop.f32.mrf.mxu0
        %921 = vmatprep.mubr.f32.mxu0 0.0
        %922 = vmatmul.mubr.f32.gmra.mxu0 %v702
        %v923 = vpop.f32.mrf.mxu0
        %v924 = vadd.f32 %v603, %v923
        %v925 = vpop.f32.mrf.mxu0
        %926 = vmatprep.mubr.f32.mxu0 0.0
        %927 = vmatmul.mubr.f32.gmra.mxu0 %v705
        %v928 = vpop.f32.mrf.mxu0
        %v929 = vadd.f32 %v608, %v928
        %v930 = vpop.f32.mrf.mxu0
        %931 = vdwg.mxu0
        %932 = vst [vmem:[%s207] sm:$0xff] %v774
        %933 = vst [vmem:[%s207 + $0x8] sm:$0xff] %v779
        %934 = vst [vmem:[%s207 + $0x10] sm:$0xff] %v784
        %935 = vst [vmem:[%s207 + $0x18] sm:$0xff] %v789
        %936 = vst [vmem:[%s207 + $0x20] sm:$0xff] %v794
        %937 = vst [vmem:[%s207 + $0x28] sm:$0xff] %v799
        %938 = vst [vmem:[%s207 + $0x30] sm:$0xff] %v804
        %939 = vst [vmem:[%s207 + $0x38] sm:$0xff] %v809
        %940 = vst [vmem:[%s207 + $0x40] sm:$0xff] %v814
        %941 = vst [vmem:[%s207 + $0x48] sm:$0xff] %v819
        %942 = vst [vmem:[%s207 + $0x50] sm:$0xff] %v824
        %943 = vst [vmem:[%s207 + $0x58] sm:$0xff] %v829
        %944 = vst [vmem:[%s207 + $0x60] sm:$0xff] %v834
        %945 = vst [vmem:[%s207 + $0x68] sm:$0xff] %v839
        %946 = vst [vmem:[%s207 + $0x70] sm:$0xff] %v844
        %947 = vst [vmem:[%s207 + $0x78] sm:$0xff] %v849
        %948 = vst [vmem:[%s207 + $0x80] sm:$0xff] %v854
        %949 = vst [vmem:[%s207 + $0x88] sm:$0xff] %v859
        %950 = vst [vmem:[%s207 + $0x90] sm:$0xff] %v864
        %951 = vst [vmem:[%s207 + $0x98] sm:$0xff] %v869
        %952 = vst [vmem:[%s207 + $0xa0] sm:$0xff] %v874
        %953 = vst [vmem:[%s207 + $0xa8] sm:$0xff] %v879
        %954 = vst [vmem:[%s207 + $0xb0] sm:$0xff] %v884
        %955 = vst [vmem:[%s207 + $0xb8] sm:$0xff] %v889
        %956 = vst [vmem:[%s207 + $0xc0] sm:$0xff] %v894
        %957 = vst [vmem:[%s207 + $0xc8] sm:$0xff] %v899
        %958 = vst [vmem:[%s207 + $0xd0] sm:$0xff] %v904
        %959 = vst [vmem:[%s207 + $0xd8] sm:$0xff] %v909
        %960 = vst [vmem:[%s207 + $0xe0] sm:$0xff] %v914
        %961 = vst [vmem:[%s207 + $0xe8] sm:$0xff] %v919
        %962 = vst [vmem:[%s207 + $0xf0] sm:$0xff] %v924
        %963 = vst [vmem:[%s207 + $0xf8] sm:$0xff] %v929
        %s964 = sand.u32 %s120, 1
        %s965 = scalar_lea.sflag [#allocation3], %s964
        %s966 = sand.u32 %s120, 1
        %s967 = smul.addr %s966, 256
        %s968 = scalar_lea.vmem [#allocation2], %s967
        // Predicated region
        $region37: #{tpu_custom_call.1} parent=35 // pred_check
          %p969 = pneg %p130
        $region38: #{tpu_custom_call.1} parent=35 // pred_check_branch
          %971 = sbr.rel (%p969) target = $region40
        $region39: #{tpu_custom_call.1} parent=35 // pred_region
          %s972 = smul.u32 32, %s18
          %s974 = ssub.s32 4096, 4096
          %975 = vsyncadd %s965, %s974
          %s976 = smul.addr %s972, 128
          %s977 = scalar_lea.hbm %s4, %s976
          %s978 = sshll.u32 %s968, 4
          %s979 = int_to_ptr.vmem [resolvable:$true] %s978
          %984 = dma.vmem_to_hbm [thread:$0]  %s979, 4096, %s977, %s965, 128, 128, 8
        $region40: #{tpu_custom_call.1} parent=35 // pred_fallthru
          _
      $region36: #{tpu_custom_call.1} parent=5 // pred_fallthru
        _
      %p985 = scmp.le.s32.totalorder 2, %s13
      // Predicated region
      $region41: #{tpu_custom_call.1} parent=5 // pred_check
        %p986 = pneg %p985
      $region42: #{tpu_custom_call.1} parent=5 // pred_check_branch
        %988 = sbr.rel (%p986) target = $region44
      $region43: #{tpu_custom_call.1} parent=5 // pred_region
        %s989 = ssub.s32 %s13, 2
        // Predicated region
        $region45: #{tpu_custom_call.1} parent=43 // pred_check
          %p990 = pneg %p136
        $region46: #{tpu_custom_call.1} parent=43 // pred_check_branch
          %992 = sbr.rel (%p990) target = $region48
        $region47: #{tpu_custom_call.1} parent=43 // pred_region
          %s993 = sand.u32 %s121, 1
          %s994 = scalar_lea.sflag [#allocation3], %s993
          %s995 = sand.u32 %s121, 1
          %s996 = smul.addr %s995, 256
          %s997 = scalar_lea.vmem [#allocation2], %s996
          %998 = dma.done %s994, 4096
        $region48: #{tpu_custom_call.1} parent=43 // pred_fallthru
          _
      $region44: #{tpu_custom_call.1} parent=5 // pred_fallthru
        _
    $region6: #{tpu_custom_call.1} parent=1 // loop_footer
      %s17 = sadd.s32 1, %s13
    $region7: #{tpu_custom_call.1} parent=1 // loop_footer_branch
      %12 = sbr.rel target = $region3
    $region8: #{tpu_custom_call.1} parent=1 // loop_exit
      _
    %999 = vsyncpa [#allocation3], 1
    %s1000 = scalar_lea.sflag [#allocation3], 1
    %1001 = vsyncpa %s1000, 1

</llo_original>
